<compile_context>
chip_gen: v5e
topology: v5e:2x2
jax: 0.10.0
libtpu: 0.0.40
codegen_flags: <defaults>
</compile_context>

<pallas_src>
import jax
import jax.numpy as jnp
from jax.experimental import pallas as pl
from jax.experimental.pallas import tpu as pltpu


def _inject_noise_kernel(x_ref, w_ref, n_ref, o_ref):
    # x_ref: (C_blk, H*W)  activations for one channel-block of one batch element
    # w_ref: (C_blk, 1)    per-channel learned bias (broadcast over lanes)
    # n_ref: (1, H*W)      per-batch noise map      (broadcast over sublanes)
    o_ref[...] = x_ref[...] + w_ref[...] + n_ref[...]


def _choose_channel_block(C, HW, itemsize, target_bytes=2 * 1024 * 1024):
    """Pick the channel block: ~target_bytes per x-block, multiple of 8 (TPU
    sublane rule) or the full C, and dividing C evenly."""
    c_blk = max(1, target_bytes // (HW * itemsize))
    if c_blk >= C:
        return C
    c_blk = max(8, (c_blk // 8) * 8)
    while c_blk > 8 and C % c_blk != 0:
        c_blk -= 8
    if C % c_blk != 0:
        return C  # always-legal fallback: full channel dim
    return int(c_blk)


def inject_noise(x, weight, noise):
    """x: (B, C, H, W); weight: (1, C, 1, 1); noise: (B, 1, H, W).
    Returns x + weight + noise (broadcasting), computed in a Pallas kernel."""
    B, C, H, W = x.shape
    HW = H * W
    itemsize = jnp.dtype(x.dtype).itemsize

    # Lane-dense layout: collapse (H, W) into a single H*W last dim.
    x2 = x.reshape(B, C, HW)
    n2 = noise.reshape(B, 1, HW)
    w2 = weight.reshape(C, 1).astype(x.dtype)

    c_blk = _choose_channel_block(C, HW, itemsize)
    grid = (B, C // c_blk)

    # Double-buffered working set: (x + out) blocks dominate; noise/weight tiny.
    block_bytes = itemsize * (2 * c_blk * HW + HW + c_blk)
    vmem_limit = int(min(48 * 1024 * 1024, max(16 * 1024 * 1024, 3 * block_bytes)))

    out = pl.pallas_call(
        _inject_noise_kernel,
        out_shape=jax.ShapeDtypeStruct((B, C, HW), x.dtype),
        grid=grid,
        in_specs=[
            # (c_blk, HW) activation slab for (batch b, channel block c).
            pl.BlockSpec((None, c_blk, HW), lambda b, c: (b, c, 0)),
            # Whole channel-block of weights in one tiny DMA, broadcast in-kernel.
            pl.BlockSpec((c_blk, 1), lambda b, c: (c, 0)),
            # Per-batch noise map, shared across the channel axis.
            pl.BlockSpec((None, 1, HW), lambda b, c: (b, 0, 0)),
        ],
        out_specs=pl.BlockSpec((None, c_blk, HW), lambda b, c: (b, c, 0)),
        compiler_params=pltpu.CompilerParams(
            dimension_semantics=("parallel", "parallel"),
            vmem_limit_bytes=vmem_limit,
        ),
    )(x2, w2, n2)

    return out.reshape(B, C, H, W)


def inject_noise_module(x, weight, key):
    """Full forward of injectNoise: sample noise ~ N(0,1) of shape (B, 1, H, W),
    then x + weight + noise (elementwise add done in Pallas)."""
    B, _, H, W = x.shape
    # Sample in float32 then cast (mirrors torch.randn numerics for bf16 x).
    noise = jax.random.normal(key, (B, 1, H, W), dtype=jnp.float32).astype(x.dtype)
    return inject_noise(x, weight, noise), noise


if __name__ == "__main__":
    B, C, H, W = 2, 4, 16, 16

    key = jax.random.PRNGKey(0)
    kx, knoise = jax.random.split(key)

    x = jax.random.normal(kx, (B, C, H, W), dtype=jnp.float32)
    # Parameter init in the module is zeros; use a nonzero weight here so the
    # per-channel broadcast path is actually exercised by the correctness check.
    weight = jnp.arange(C, dtype=jnp.float32).reshape(1, C, 1, 1) * 0.1

    out, noise = inject_noise_module(x, weight, knoise)
    out = jax.block_until_ready(out)

    # Reference (plain JAX broadcasting) check.
    ref = x + weight + noise
    assert out.shape == (B, C, H, W)
    assert jnp.allclose(out, ref, atol=1e-6), "mismatch vs reference"

    print("KERNEL_OK")
</pallas_src>

<mosaic_0001>
module attributes {stable_mosaic.version = 11 : i64} {
  func.func @_inject_noise_kernel(%arg0: i32, %arg1: i32, %arg2: memref<1x4x256xf32, #tpu.memory_space<vmem>>, %arg3: memref<4x1xf32, #tpu.memory_space<vmem>>, %arg4: memref<1x1x256xf32, #tpu.memory_space<vmem>>, %arg5: memref<1x4x256xf32, #tpu.memory_space<vmem>>) attributes {dimension_semantics = [#tpu.dimension_semantics<parallel>, #tpu.dimension_semantics<parallel>], iteration_bounds = array<i64: 2, 1>, scalar_prefetch = 0 : i64, scratch_operands = 0 : i64, tpu.core_type = #tpu.core_type<tc>, window_params = [{transform_indices = @transform_0, window_bounds = array<i64: 1, 4, 256>}, {transform_indices = @transform_1, window_bounds = array<i64: 4, 1>}, {transform_indices = @transform_2, window_bounds = array<i64: 1, 1, 256>}, {transform_indices = @transform_3, window_bounds = array<i64: 1, 4, 256>}]} {
    %c0 = arith.constant 0 : index
    %c0_0 = arith.constant 0 : index
    %c0_1 = arith.constant 0 : index
    %0 = vector.load %arg2[%c0, %c0_0, %c0_1] : memref<1x4x256xf32, #tpu.memory_space<vmem>>, vector<1x4x256xf32>
    %1 = vector.shape_cast %0 : vector<1x4x256xf32> to vector<4x256xf32>
    %c0_2 = arith.constant 0 : index
    %c0_3 = arith.constant 0 : index
    %2 = vector.load %arg3[%c0_2, %c0_3] : memref<4x1xf32, #tpu.memory_space<vmem>>, vector<4x1xf32>
    %3 = vector.broadcast %2 : vector<4x1xf32> to vector<4x256xf32>
    %4 = arith.addf %1, %3 : vector<4x256xf32>
    %c0_4 = arith.constant 0 : index
    %c0_5 = arith.constant 0 : index
    %c0_6 = arith.constant 0 : index
    %5 = vector.load %arg4[%c0_4, %c0_5, %c0_6] : memref<1x1x256xf32, #tpu.memory_space<vmem>>, vector<1x1x256xf32>
    %6 = vector.shape_cast %5 : vector<1x1x256xf32> to vector<1x256xf32>
    %7 = vector.broadcast %6 : vector<1x256xf32> to vector<4x256xf32>
    %8 = arith.addf %4, %7 : vector<4x256xf32>
    %c0_7 = arith.constant 0 : index
    %c0_8 = arith.constant 0 : index
    %c0_9 = arith.constant 0 : index
    %9 = vector.load %arg5[%c0_7, %c0_8, %c0_9] : memref<1x4x256xf32, #tpu.memory_space<vmem>>, vector<1x4x256xf32>
    %10 = vector.shape_cast %9 : vector<1x4x256xf32> to vector<4x256xf32>
    %11 = vector.shape_cast %8 : vector<4x256xf32> to vector<1x4x256xf32>
    tpu.vector_store %arg5[%c0_7, %c0_8, %c0_9], %11 {strides = array<i32>} : memref<1x4x256xf32, #tpu.memory_space<vmem>>, vector<1x4x256xf32>,
    return
  }
  func.func @transform_0(%arg0: i32, %arg1: i32) -> (i32, i32, i32) {
    %c0_i32 = arith.constant 0 : i32
    %c0_i32_0 = arith.constant 0 : i32
    return %arg0, %arg1, %c0_i32 : i32, i32, i32
  }
  func.func @transform_1(%arg0: i32, %arg1: i32) -> (i32, i32) {
    %c0_i32 = arith.constant 0 : i32
    %c0_i32_0 = arith.constant 0 : i32
    return %arg1, %c0_i32 : i32, i32
  }
  func.func @transform_2(%arg0: i32, %arg1: i32) -> (i32, i32, i32) {
    %c0_i32 = arith.constant 0 : i32
    %c0_i32_0 = arith.constant 0 : i32
    %c0_i32_1 = arith.constant 0 : i32
    return %arg0, %c0_i32, %c0_i32_0 : i32, i32, i32
  }
  func.func @transform_3(%arg0: i32, %arg1: i32) -> (i32, i32, i32) {
    %c0_i32 = arith.constant 0 : i32
    %c0_i32_0 = arith.constant 0 : i32
    return %arg0, %arg1, %c0_i32 : i32, i32, i32
  }
}

</mosaic_0001>

<llo_original>
// kernel: tpu_custom_call.1
$region0: #{tpu_custom_call.1}
  #allocation0 [shape = 'u32[]', space=smem, size = 0x4, offset = 0x4, fixed_abs, tag = 'smem constant byte address 0x4 - core index']
  #allocation1 [shape = 'u32[72,128]{1,0:T(1,128)}', space=vmem, size = 0x9000, scoped, tag = 'internal scratch']
  %s0 = inlined_call_operand.hbm [shape: f32[2,4,256], index: 0, kind: input, shape index: {}]
  %s1 = inlined_call_operand.vmem [shape: f32[4,1], index: 1, kind: input, shape index: {}]
  %s2 = inlined_call_operand.vmem [shape: f32[2,1,256], index: 2, kind: input, shape index: {}]
  %s3 = inlined_call_operand.hbm [shape: f32[2,4,256], index: 3, kind: output, shape index: {}]
  %s4 = sld [smem:[#allocation0]]
  $region49: #{tpu_custom_call.1} parent=0
    _
  %s6 = ssub.s32 1, %s4
  %s7 = scalar_select 0, %s6, %s4
  $region1: #{tpu_custom_call.1} parent=0
    #allocation2 [shape = 'u8[8192]{0}', space=vmem, size = 0x2000, scoped, tag = 'input window, operand 0']
    #allocation3 [shape = 's32[2]{0}', space=sflag, size = 0x8, scoped, tag = 'scoped memory for tpu_custom_call.1']
    #allocation4 [shape = 's32[2]{0}', space=sflag, size = 0x8, scoped, tag = 'scoped memory for tpu_custom_call.1']
    #allocation5 [shape = 'u8[8192]{0}', space=vmem, size = 0x2000, scoped, tag = 'output window, operand 0']
    %8 = vsyncpa [#allocation3], 0
    %s9 = scalar_lea.sflag [#allocation3], 1
    %10 = vsyncpa %s9, 0
    %11 = vsyncpa [#allocation4], 0
    %s12 = scalar_lea.sflag [#allocation4], 1
    %13 = vsyncpa %s12, 0
    loop: start=0, step=1, limit=4
    $region2: #{tpu_custom_call.1} parent=1 // loop_pre_header
      _
    $region3: #{tpu_custom_call.1} parent=1 // loop_header
      %s15 = sphi 0, %s19
      %p16 = scmp.ge.s32.totalorder %s15, 4
      %s22 = sphi 0, %s34
      %s23 = sphi 0, %s30
      %s24 = sphi 0, %s22
      %s25 = sphi 0, %s23
      %s26 = sphi 0, %s24
      %s27 = sphi 0, %s25
      %s39 = sphi 0, %s41
      %s42 = sphi 0, %s39
      %s43 = sphi 0, %s42
      %s59 = sphi 0, %s43
      %s65 = sphi 0, %s67
      %s68 = sphi 0, %s65
      %s69 = sphi 0, %s68
      %s85 = sphi 0, %s69
      %s91 = sphi 0, %s93
      %s94 = sphi 0, %s91
      %s95 = sphi 0, %s94
      %s111 = sphi 0, %s95
      %s119 = sphi 0, %s121
      %s122 = sphi 0, %s119
      %s123 = sphi 0, %s122
      %s139 = sphi 0, %s123
    $region4: #{tpu_custom_call.1} parent=1 // loop_header_branch
      %18 = sbr.rel (%p16) target = $region8
    $region5: #{tpu_custom_call.1} parent=1 // loop_body
      %s20 = ssub.s32 %s15, 1
      %s21 = ssub.s32 %s15, 2
      %s28 = sadd.s32 1, %s23
      %p29 = scmp.ge.s32.totalorder %s28, 1
      %s30 = scalar_select %p29, 0, %s28
      %s31 = sadd.s32 1, %s22
      %s32 = scalar_select %p29, %s31, %s22
      %p33 = scmp.ge.s32.totalorder %s32, 2
      %s34 = scalar_select %p33, 0, %s32
      %s35 = ssub.s32 %s22, %s34
      %s36 = ssub.s32 %s23, %s30
      %s37 = sor.u32 %s35, %s36
      %p38 = scmp.eq.s32.totalorder %s37, 0
      %s40 = sadd.s32 %s39, 1
      %s41 = scalar_select %p38, %s39, %s40
      %p44 = pneg %p38
      %p45 = scmp.eq.s32.totalorder %s15, 1
      %p46 = por %p44, %p45
      %p47 = scmp.ne.s32.totalorder %s39, %s42
      %p48 = scmp.eq.s32.totalorder %s15, 0
      %p49 = por %p47, %p48
      %p50 = scmp.ne.s32.totalorder %s39, %s42
      %p51 = scmp.eq.s32.totalorder %s20, 1
      %p52 = por %p50, %p51
      %p53 = scmp.ne.s32.totalorder %s42, %s43
      %p54 = scmp.eq.s32.totalorder %s20, 0
      %p55 = por %p53, %p54
      %p56 = scmp.ne.s32.totalorder %s42, %s43
      %p57 = scmp.eq.s32.totalorder %s21, 1
      %p58 = por %p56, %p57
      %p60 = scmp.ne.s32.totalorder %s43, %s59
      %p61 = scmp.eq.s32.totalorder %s21, 0
      %p62 = por %p60, %p61
      %s63 = ssub.s32 %s23, %s30
      %p64 = scmp.eq.s32.totalorder %s63, 0
      %s66 = sadd.s32 %s65, 1
      %s67 = scalar_select %p64, %s65, %s66
      %p70 = pneg %p64
      %p71 = scmp.eq.s32.totalorder %s15, 1
      %p72 = por %p70, %p71
      %p73 = scmp.ne.s32.totalorder %s65, %s68
      %p74 = scmp.eq.s32.totalorder %s15, 0
      %p75 = por %p73, %p74
      %p76 = scmp.ne.s32.totalorder %s65, %s68
      %p77 = scmp.eq.s32.totalorder %s20, 1
      %p78 = por %p76, %p77
      %p79 = scmp.ne.s32.totalorder %s68, %s69
      %p80 = scmp.eq.s32.totalorder %s20, 0
      %p81 = por %p79, %p80
      %p82 = scmp.ne.s32.totalorder %s68, %s69
      %p83 = scmp.eq.s32.totalorder %s21, 1
      %p84 = por %p82, %p83
      %p86 = scmp.ne.s32.totalorder %s69, %s85
      %p87 = scmp.eq.s32.totalorder %s21, 0
      %p88 = por %p86, %p87
      %s89 = ssub.s32 %s22, %s34
      %p90 = scmp.eq.s32.totalorder %s89, 0
      %s92 = sadd.s32 %s91, 1
      %s93 = scalar_select %p90, %s91, %s92
      %p96 = pneg %p90
      %p97 = scmp.eq.s32.totalorder %s15, 1
      %p98 = por %p96, %p97
      %p99 = scmp.ne.s32.totalorder %s91, %s94
      %p100 = scmp.eq.s32.totalorder %s15, 0
      %p101 = por %p99, %p100
      %p102 = scmp.ne.s32.totalorder %s91, %s94
      %p103 = scmp.eq.s32.totalorder %s20, 1
      %p104 = por %p102, %p103
      %p105 = scmp.ne.s32.totalorder %s94, %s95
      %p106 = scmp.eq.s32.totalorder %s20, 0
      %p107 = por %p105, %p106
      %p108 = scmp.ne.s32.totalorder %s94, %s95
      %p109 = scmp.eq.s32.totalorder %s21, 1
      %p110 = por %p108, %p109
      %p112 = scmp.ne.s32.totalorder %s95, %s111
      %p113 = scmp.eq.s32.totalorder %s21, 0
      %p114 = por %p112, %p113
      %s115 = ssub.s32 %s22, %s34
      %s116 = ssub.s32 %s23, %s30
      %s117 = sor.u32 %s115, %s116
      %p118 = scmp.eq.s32.totalorder %s117, 0
      %s120 = sadd.s32 %s119, 1
      %s121 = scalar_select %p118, %s119, %s120
      %p124 = pneg %p118
      %p125 = scmp.eq.s32.totalorder %s15, 1
      %p126 = por %p124, %p125
      %p127 = scmp.ne.s32.totalorder %s119, %s122
      %p128 = scmp.eq.s32.totalorder %s15, 0
      %p129 = por %p127, %p128
      %p130 = scmp.ne.s32.totalorder %s119, %s122
      %p131 = scmp.eq.s32.totalorder %s20, 1
      %p132 = por %p130, %p131
      %p133 = scmp.ne.s32.totalorder %s122, %s123
      %p134 = scmp.eq.s32.totalorder %s20, 0
      %p135 = por %p133, %p134
      %p136 = scmp.ne.s32.totalorder %s122, %s123
      %p137 = scmp.eq.s32.totalorder %s21, 1
      %p138 = por %p136, %p137
      %p140 = scmp.ne.s32.totalorder %s123, %s139
      %p141 = scmp.eq.s32.totalorder %s21, 0
      %p142 = por %p140, %p141
      %p143 = scmp.le.s32.totalorder 1, %s15
      %p144 = scmp.lt.s32.totalorder %s15, 3
      %p145 = pnand %p143, %p144
      %p146 = pneg %p145
      // Predicated region
      $region9: #{tpu_custom_call.1} parent=5 // pred_check
        _
      $region10: #{tpu_custom_call.1} parent=5 // pred_check_branch
        %148 = sbr.rel (%p145) target = $region12
      $region11: #{tpu_custom_call.1} parent=5 // pred_region
        %s149 = ssub.s32 %s15, 1
        // Predicated region
        $region13: #{tpu_custom_call.1} parent=11 // pred_check
          %p150 = pneg %p81
        $region14: #{tpu_custom_call.1} parent=11 // pred_check_branch
          %152 = sbr.rel (%p150) target = $region16
        $region15: #{tpu_custom_call.1} parent=11 // pred_region
          %p153 = scmp.lt.s32.totalorder %s25, 0
          %s154 = scalar_select %p153, %s25, 0
          %s155 = smul.addr %s154, 4
          %s156 = scalar_lea.vmem %s1, %s155
        $region16: #{tpu_custom_call.1} parent=11 // pred_fallthru
          _
      $region12: #{tpu_custom_call.1} parent=5 // pred_fallthru
        _
      %p157 = scmp.lt.s32.totalorder %s15, 2
      // Predicated region
      $region17: #{tpu_custom_call.1} parent=5 // pred_check
        %p158 = pneg %p157
      $region18: #{tpu_custom_call.1} parent=5 // pred_check_branch
        %160 = sbr.rel (%p158) target = $region20
      $region19: #{tpu_custom_call.1} parent=5 // pred_region
        // Predicated region
        $region21: #{tpu_custom_call.1} parent=19 // pred_check
          %p161 = pneg %p49
        $region22: #{tpu_custom_call.1} parent=19 // pred_check_branch
          %163 = sbr.rel (%p161) target = $region24
        $region23: #{tpu_custom_call.1} parent=19 // pred_region
          %s164 = sand.u32 %s39, 1
          %s165 = scalar_lea.sflag [#allocation3], %s164
          %s166 = sand.u32 %s39, 1
          %s167 = smul.addr %s166, 8
          %s168 = scalar_lea.vmem [#allocation2], %s167
          %170 = vsyncadd %s165, 0
          %s171 = smul.addr %s23, 2
          %s172 = smul.addr %s22, 2
          %s173 = sadd.s32 %s171, %s172
          %s174 = smul.addr %s173, 4
          %s175 = scalar_lea.hbm %s0, %s174
          %s177 = sshll.u32 %s175, 4
          %s178 = int_to_ptr.hbm [resolvable:$true] %s177
          %s179 = sshll.u32 %s168, 4
          %s180 = int_to_ptr.vmem [resolvable:$true] %s179
          %182 = dma.hbm_to_vmem [thread:$0]  %s178, 128, %s180, %s165
        $region24: #{tpu_custom_call.1} parent=19 // pred_fallthru
          _
        // Predicated region
        $region25: #{tpu_custom_call.1} parent=19 // pred_check
          %p183 = pneg %p101
        $region26: #{tpu_custom_call.1} parent=19 // pred_check_branch
          %185 = sbr.rel (%p183) target = $region28
        $region27: #{tpu_custom_call.1} parent=19 // pred_region
          %p186 = scmp.lt.s32.totalorder %s22, 1
          %s187 = scalar_select %p186, %s22, 1
          %s188 = smul.addr %s187, 2
          %s189 = scalar_lea.vmem %s2, %s188
        $region28: #{tpu_custom_call.1} parent=19 // pred_fallthru
          _
      $region20: #{tpu_custom_call.1} parent=5 // pred_fallthru
        _
      %p190 = scmp.le.s32.totalorder 1, %s15
      %p191 = scmp.lt.s32.totalorder %s15, 3
      %p192 = pnand %p190, %p191
      %p193 = pneg %p192
      // Predicated region
      $region29: #{tpu_custom_call.1} parent=5 // pred_check
        _
      $region30: #{tpu_custom_call.1} parent=5 // pred_check_branch
        %195 = sbr.rel (%p192) target = $region32
      $region31: #{tpu_custom_call.1} parent=5 // pred_region
        %s196 = ssub.s32 %s15, 1
        %s197 = sand.u32 %s42, 1
        %s198 = scalar_lea.sflag [#allocation3], %s197
        %s199 = sand.u32 %s42, 1
        %s200 = smul.addr %s199, 8
        %s201 = scalar_lea.vmem [#allocation2], %s200
        // Predicated region
        $region33: #{tpu_custom_call.1} parent=31 // pred_check
          %p202 = pneg %p55
        $region34: #{tpu_custom_call.1} parent=31 // pred_check_branch
          %204 = sbr.rel (%p202) target = $region36
        $region35: #{tpu_custom_call.1} parent=31 // pred_region
          %206 = dma.done %s198, 128
        $region36: #{tpu_custom_call.1} parent=31 // pred_fallthru
          _
        %s207 = sand.u32 %s42, 1
        %s208 = scalar_lea.sflag [#allocation3], %s207
        %s209 = sand.u32 %s42, 1
        %s210 = smul.addr %s209, 8
        %s211 = scalar_lea.vmem [#allocation2], %s210
        %p212 = pneg %p55
        %p213 = pneg %p52
        %p214 = scmp.lt.s32.totalorder %s25, 0
        %s215 = scalar_select %p214, %s25, 0
        %s216 = smul.addr %s215, 4
        %s217 = scalar_lea.vmem %s1, %s216
        %p218 = pneg %p81
        %p219 = pneg %p78
        %p220 = scmp.lt.s32.totalorder %s24, 1
        %s221 = scalar_select %p220, %s24, 1
        %s222 = smul.addr %s221, 2
        %s223 = scalar_lea.vmem %s2, %s222
        %p224 = pneg %p107
        %p225 = pneg %p104
        %p226 = pneg %p135
        %p227 = pneg %p132
        %s228 = sand.u32 %s122, 1
        %s229 = scalar_lea.sflag [#allocation4], %s228
        %s230 = sand.u32 %s122, 1
        %s231 = smul.addr %s230, 8
        %s232 = scalar_lea.vmem [#allocation5], %s231
        %p233 = scmp.lt.s32.totalorder %s25, 0
        %s234 = scalar_select %p233, %s25, 0
        %s235 = smul.addr %s234, 4
        %s236 = scalar_lea.vmem %s1, %s235
        %p237 = scmp.lt.s32.totalorder %s24, 1
        %s238 = scalar_select %p237, %s24, 1
        %s239 = smul.addr %s238, 2
        %s240 = scalar_lea.vmem %s2, %s239
        %v241 = vld [vmem:[%s201] sm:$0xff]
        %v242 = vld [vmem:[%s236] sm:$0xf]
        %244 = vset.pattern.permute.xlu0 0
        %245 = vperm.xlu0 %244, %v242
        %v246 = vpop.permute.xlu0 %245
        %v248 = vunpack.c.l.s4 839922192
        %v249 = vunpack.c.0.s8 %v248
        %v250 = vperm.slane %v246, %v249
        %v252 = vadd.f32 %v241, %v250
        %v253 = vld [vmem:[%s240] sm:$0x3]
        %v255 = vperm.slane %v253, 0
        %v256 = vperm.slane %v253, 1
        %v257 = vrot.slane %v256, 4
        %vm258 = vcmask 1043456
        %v259 = vsel %vm258, %v255, %v257
        %v261 = vadd.f32 %v252, %v259
        %262 = vst [vmem:[%s232] sm:$0xff] %v261
        %s263 = sand.u32 %s122, 1
        %s264 = scalar_lea.sflag [#allocation4], %s263
        %s265 = sand.u32 %s122, 1
        %s266 = smul.addr %s265, 8
        %s267 = scalar_lea.vmem [#allocation5], %s266
        // Predicated region
        $region37: #{tpu_custom_call.1} parent=31 // pred_check
          %p268 = pneg %p132
        $region38: #{tpu_custom_call.1} parent=31 // pred_check_branch
          %270 = sbr.rel (%p268) target = $region40
        $region39: #{tpu_custom_call.1} parent=31 // pred_region
          %272 = vsyncadd %s264, 0
          %s273 = smul.addr %s25, 2
          %s274 = smul.addr %s24, 2
          %s275 = sadd.s32 %s273, %s274
          %s276 = smul.addr %s275, 4
          %s277 = scalar_lea.hbm %s3, %s276
          %s279 = sshll.u32 %s267, 4
          %s280 = int_to_ptr.vmem [resolvable:$true] %s279
          %s281 = sshll.u32 %s277, 4
          %s282 = int_to_ptr.hbm [resolvable:$true] %s281
          %284 = dma.vmem_to_hbm [thread:$0]  %s280, 128, %s282, %s264
        $region40: #{tpu_custom_call.1} parent=31 // pred_fallthru
          _
      $region32: #{tpu_custom_call.1} parent=5 // pred_fallthru
        _
      %p285 = scmp.le.s32.totalorder 2, %s15
      // Predicated region
      $region41: #{tpu_custom_call.1} parent=5 // pred_check
        %p286 = pneg %p285
      $region42: #{tpu_custom_call.1} parent=5 // pred_check_branch
        %288 = sbr.rel (%p286) target = $region44
      $region43: #{tpu_custom_call.1} parent=5 // pred_region
        %s289 = ssub.s32 %s15, 2
        // Predicated region
        $region45: #{tpu_custom_call.1} parent=43 // pred_check
          %p290 = pneg %p138
        $region46: #{tpu_custom_call.1} parent=43 // pred_check_branch
          %292 = sbr.rel (%p290) target = $region48
        $region47: #{tpu_custom_call.1} parent=43 // pred_region
          %s293 = sand.u32 %s123, 1
          %s294 = scalar_lea.sflag [#allocation4], %s293
          %s295 = sand.u32 %s123, 1
          %s296 = smul.addr %s295, 8
          %s297 = scalar_lea.vmem [#allocation5], %s296
          %299 = dma.done %s294, 128
        $region48: #{tpu_custom_call.1} parent=43 // pred_fallthru
          _
      $region44: #{tpu_custom_call.1} parent=5 // pred_fallthru
        _
    $region6: #{tpu_custom_call.1} parent=1 // loop_footer
      %s19 = sadd.s32 1, %s15
    $region7: #{tpu_custom_call.1} parent=1 // loop_footer_branch
      %14 = sbr.rel target = $region3
    $region8: #{tpu_custom_call.1} parent=1 // loop_exit
      _
    %300 = vsyncpa [#allocation3], 1
    %s301 = scalar_lea.sflag [#allocation3], 1
    %302 = vsyncpa %s301, 1
    %303 = vsyncpa [#allocation4], 1
    %s304 = scalar_lea.sflag [#allocation4], 1
    %305 = vsyncpa %s304, 1

</llo_original>
